<compile_context>
chip_gen: v5e
topology: v5e:2x2
jax: 0.10.0
libtpu: 0.0.40
codegen_flags: <defaults>
</compile_context>

<pallas_src>
import jax
import jax.numpy as jnp
import numpy as np
from jax.experimental import pallas as pl
from jax.experimental.pallas import tpu as pltpu


def _round_up(x, m):
    return ((x + m - 1) // m) * m


def _copy_cast_kernel(x_ref, o_ref):
    # torch.tensor(vertices, dtype=torch.float32): the only numeric work is a
    # contiguous copy + cast to float32, done here on a lane-dense tile.
    o_ref[...] = x_ref[...].astype(jnp.float32)


def load_obj_transform(material_flat_vertices, *, target_block_bytes=2 << 20):
    """Pallas equivalent of LoadOBJTransform.forward's numeric core.

    material_flat_vertices: (M, 3*V) — flat per-material vertex buffers
        (what `material.vertices` holds after pywavefront parsing; any float dtype).
    Returns: (M*V, 3) float32 — stacked vertex tensor, same as the torch module.
    """
    M, C = material_flat_vertices.shape
    assert C % 3 == 0
    in_bytes = jnp.dtype(material_flat_vertices.dtype).itemsize

    # Sublane-axis tile: full dim when small (always a legal block size),
    # otherwise a multiple of 8 with masked boundary blocks.
    tile_m = M if M <= 256 else 256

    # Lane-axis tile: full dim when it fits the per-block budget (always legal),
    # otherwise a multiple of 128 sized so one input block is ~target_block_bytes.
    target_elems = max(128, target_block_bytes // in_bytes)
    tile_c_cap = max(128, _round_up(pl.cdiv(target_elems, tile_m), 128))
    tile_c = C if C <= tile_c_cap else tile_c_cap

    grid = (pl.cdiv(M, tile_m), pl.cdiv(C, tile_c))

    out2d = pl.pallas_call(
        _copy_cast_kernel,
        out_shape=jax.ShapeDtypeStruct((M, C), jnp.float32),
        grid_spec=pl.GridSpec(
            grid=grid,
            in_specs=[pl.BlockSpec((tile_m, tile_c), lambda i, j: (i, j))],
            out_specs=pl.BlockSpec((tile_m, tile_c), lambda i, j: (i, j)),
        ),
        compiler_params=pltpu.CompilerParams(
            # Every tile is independent: lets v7x shard the copy over its 2 TCs.
            dimension_semantics=("parallel", "parallel"),
            vmem_limit_bytes=32 * 1024 * 1024,
        ),
    )(material_flat_vertices)

    # The per-material stride-3 walk + (N, 3) stacking is, for contiguous
    # buffers, a free row-major reshape outside the kernel.
    return out2d.reshape(-1, 3)


if __name__ == "__main__":
    key = jax.random.PRNGKey(0)
    k1, k2, k3 = jax.random.split(key, 3)

    # Case 1: evenly-divisible path (single lane-dense block). M=2, V=2048.
    M1, V1 = 2, 2048
    mats1 = jax.random.normal(k1, (M1, 3 * V1), dtype=jnp.float32)
    out1 = jax.block_until_ready(load_obj_transform(mats1))
    ref1 = np.asarray(mats1).reshape(M1 * V1, 3).astype(np.float32)
    assert out1.shape == (M1 * V1, 3) and out1.dtype == jnp.float32
    np.testing.assert_allclose(np.asarray(out1), ref1, rtol=0, atol=0)

    # Case 2: ragged column count, no host-side padding. M=2, V=680 -> C=2040.
    M2, V2 = 2, 680
    mats2 = jax.random.normal(k2, (M2, 3 * V2), dtype=jnp.float32)
    out2 = jax.block_until_ready(load_obj_transform(mats2))
    ref2 = np.asarray(mats2).reshape(M2 * V2, 3).astype(np.float32)
    assert out2.shape == (M2 * V2, 3) and out2.dtype == jnp.float32
    np.testing.assert_allclose(np.asarray(out2), ref2, rtol=0, atol=0)

    # Case 3: multi-block grid with a masked boundary column block.
    # M=16, V=344 -> C=1032; small block budget forces tile_c=1024, grid=(1, 2).
    M3, V3 = 16, 344
    mats3 = jax.random.normal(k3, (M3, 3 * V3), dtype=jnp.float32)
    out3 = jax.block_until_ready(
        load_obj_transform(mats3, target_block_bytes=64 * 1024)
    )
    ref3 = np.asarray(mats3).reshape(M3 * V3, 3).astype(np.float32)
    assert out3.shape == (M3 * V3, 3) and out3.dtype == jnp.float32
    np.testing.assert_allclose(np.asarray(out3), ref3, rtol=0, atol=0)

    print("KERNEL_OK")
</pallas_src>

<mosaic_0001>
module attributes {stable_mosaic.version = 11 : i64} {
  func.func @_copy_cast_kernel(%arg0: i32, %arg1: i32, %arg2: memref<2x6144xf32, #tpu.memory_space<vmem>>, %arg3: memref<2x6144xf32, #tpu.memory_space<vmem>>) attributes {dimension_semantics = [#tpu.dimension_semantics<parallel>, #tpu.dimension_semantics<parallel>], iteration_bounds = array<i64: 1, 1>, scalar_prefetch = 0 : i64, scratch_operands = 0 : i64, tpu.core_type = #tpu.core_type<tc>, window_params = [{transform_indices = @transform_0, window_bounds = array<i64: 2, 6144>}, {transform_indices = @transform_1, window_bounds = array<i64: 2, 6144>}]} {
    %c0 = arith.constant 0 : index
    %c0_0 = arith.constant 0 : index
    %0 = vector.load %arg2[%c0, %c0_0] : memref<2x6144xf32, #tpu.memory_space<vmem>>, vector<2x6144xf32>
    %c0_1 = arith.constant 0 : index
    %c0_2 = arith.constant 0 : index
    %1 = vector.load %arg3[%c0_1, %c0_2] : memref<2x6144xf32, #tpu.memory_space<vmem>>, vector<2x6144xf32>
    tpu.vector_store %arg3[%c0_1, %c0_2], %0 {strides = array<i32>} : memref<2x6144xf32, #tpu.memory_space<vmem>>, vector<2x6144xf32>,
    return
  }
  func.func @transform_0(%arg0: i32, %arg1: i32) -> (i32, i32) {
    %c0_i32 = arith.constant 0 : i32
    return %arg0, %arg1 : i32, i32
  }
  func.func @transform_1(%arg0: i32, %arg1: i32) -> (i32, i32) {
    %c0_i32 = arith.constant 0 : i32
    return %arg0, %arg1 : i32, i32
  }
}

</mosaic_0001>

<llo_original>
// kernel: tpu_custom_call.1
$region0: #{tpu_custom_call.1}
  #allocation0 [shape = 'u32[]', space=smem, size = 0x4, offset = 0x4, fixed_abs, tag = 'smem constant byte address 0x4 - core index']
  #allocation1 [shape = 'u32[72,128]{1,0:T(1,128)}', space=vmem, size = 0x9000, scoped, tag = 'internal scratch']
  %s0 = inlined_call_operand.hbm [shape: f32[2,6144], index: 0, kind: input, shape index: {}]
  %s1 = inlined_call_operand.hbm [shape: f32[2,6144], index: 1, kind: output, shape index: {}]
  %s2 = sld [smem:[#allocation0]]
  $region18: #{tpu_custom_call.1} parent=0
    _
  %s4 = ssub.s32 1, %s2
  %s5 = scalar_select 0, %s4, %s2
  $region1: #{tpu_custom_call.1} parent=0
    #allocation2 [shape = 'u8[49152]{0}', space=vmem, size = 0xc000, scoped, tag = 'input window, operand 0, single buffered']
    #allocation3 [shape = 's32[1]{0}', space=sflag, size = 0x4, scoped, tag = 'scoped memory for tpu_custom_call.1']
    #allocation4 [shape = 's32[1]{0}', space=sflag, size = 0x4, scoped, tag = 'scoped memory for tpu_custom_call.1']
    #allocation5 [shape = 'u8[49152]{0}', space=vmem, size = 0xc000, scoped, tag = 'output window, operand 0, single buffered']
    %6 = vsyncpa [#allocation3], 0
    %7 = vsyncpa [#allocation4], 0
    // Predicated region
    $region2: #{tpu_custom_call.1} parent=1 // pred_check
      _
    $region3: #{tpu_custom_call.1} parent=1 // pred_check_branch
      %9 = sbr.rel (0) target = $region5
    $region4: #{tpu_custom_call.1} parent=1 // pred_region
      %11 = vsyncadd [#allocation3], 0
      %s13 = sshll.u32 %s0, 4
      %s14 = int_to_ptr.hbm [resolvable:$true] %s13
      %s15 = sshll.u32 [#allocation2], 4
      %s16 = int_to_ptr.vmem [resolvable:$true] %s15
      %18 = dma.hbm_to_vmem [thread:$0]  %s14, 1536, %s16, [#allocation3]
    $region5: #{tpu_custom_call.1} parent=1 // pred_fallthru
      _
    // Predicated region
    $region6: #{tpu_custom_call.1} parent=1 // pred_check
      _
    $region7: #{tpu_custom_call.1} parent=1 // pred_check_branch
      %20 = sbr.rel (0) target = $region9
    $region8: #{tpu_custom_call.1} parent=1 // pred_region
      %22 = dma.done [#allocation3], 1536
    $region9: #{tpu_custom_call.1} parent=1 // pred_fallthru
      _
    %v23 = vld [vmem:[#allocation2] sm:$0xff]
    %v24 = vld [vmem:[#allocation2 + $0x8] sm:$0xff]
    %v25 = vld [vmem:[#allocation2 + $0x10] sm:$0xff]
    %v26 = vld [vmem:[#allocation2 + $0x18] sm:$0xff]
    %v27 = vld [vmem:[#allocation2 + $0x20] sm:$0xff]
    %v28 = vld [vmem:[#allocation2 + $0x28] sm:$0xff]
    %v29 = vld [vmem:[#allocation2 + $0x30] sm:$0xff]
    %v30 = vld [vmem:[#allocation2 + $0x38] sm:$0xff]
    %v31 = vld [vmem:[#allocation2 + $0x40] sm:$0xff]
    %v32 = vld [vmem:[#allocation2 + $0x48] sm:$0xff]
    %v33 = vld [vmem:[#allocation2 + $0x50] sm:$0xff]
    %v34 = vld [vmem:[#allocation2 + $0x58] sm:$0xff]
    %35 = vst [vmem:[#allocation5] sm:$0xff] %v23
    %36 = vst [vmem:[#allocation5 + $0x8] sm:$0xff] %v24
    %37 = vst [vmem:[#allocation5 + $0x10] sm:$0xff] %v25
    %38 = vst [vmem:[#allocation5 + $0x18] sm:$0xff] %v26
    %39 = vst [vmem:[#allocation5 + $0x20] sm:$0xff] %v27
    %40 = vst [vmem:[#allocation5 + $0x28] sm:$0xff] %v28
    %41 = vst [vmem:[#allocation5 + $0x30] sm:$0xff] %v29
    %42 = vst [vmem:[#allocation5 + $0x38] sm:$0xff] %v30
    %43 = vst [vmem:[#allocation5 + $0x40] sm:$0xff] %v31
    %44 = vst [vmem:[#allocation5 + $0x48] sm:$0xff] %v32
    %45 = vst [vmem:[#allocation5 + $0x50] sm:$0xff] %v33
    %46 = vst [vmem:[#allocation5 + $0x58] sm:$0xff] %v34
    // Predicated region
    $region10: #{tpu_custom_call.1} parent=1 // pred_check
      _
    $region11: #{tpu_custom_call.1} parent=1 // pred_check_branch
      %48 = sbr.rel (0) target = $region13
    $region12: #{tpu_custom_call.1} parent=1 // pred_region
      %50 = vsyncadd [#allocation4], 0
      %s52 = sshll.u32 [#allocation5], 4
      %s53 = int_to_ptr.vmem [resolvable:$true] %s52
      %s54 = sshll.u32 %s1, 4
      %s55 = int_to_ptr.hbm [resolvable:$true] %s54
      %57 = dma.vmem_to_hbm [thread:$0]  %s53, 1536, %s55, [#allocation4]
    $region13: #{tpu_custom_call.1} parent=1 // pred_fallthru
      _
    // Predicated region
    $region14: #{tpu_custom_call.1} parent=1 // pred_check
      _
    $region15: #{tpu_custom_call.1} parent=1 // pred_check_branch
      %59 = sbr.rel (0) target = $region17
    $region16: #{tpu_custom_call.1} parent=1 // pred_region
      %61 = dma.done [#allocation4], 1536
    $region17: #{tpu_custom_call.1} parent=1 // pred_fallthru
      _
    %62 = vsyncpa [#allocation3], 1
    %63 = vsyncpa [#allocation4], 1

</llo_original>
